<compile_context>
chip_gen: v7x
topology: tpu7x:2x2x1
jax: 0.10.0
libtpu: 0.0.40
codegen_flags: <defaults>
</compile_context>

<pallas_src>
import functools

import jax
import jax.numpy as jnp
from jax import lax
from jax.experimental import pallas as pl
from jax.experimental.pallas import tpu as pltpu


# -----------------------------------------------------------------------------
# Kernels
# -----------------------------------------------------------------------------

def _fused_kernel_1k(x_ref, w_ref, b_ref, r_ref, o_ref, *, compute_dtype):
    """Single K-step: o = x + relu(x @ W^T + b). W tile is (tn, tk) native layout."""
    acc = lax.dot_general(
        x_ref[...].astype(compute_dtype),
        w_ref[...].astype(compute_dtype),
        dimension_numbers=(((1,), (1,)), ((), ())),   # contract K of both operands
        preferred_element_type=jnp.float32)
    y = jnp.maximum(acc + b_ref[...].astype(jnp.float32), 0.0)
    o_ref[...] = (r_ref[...].astype(jnp.float32) + y).astype(o_ref.dtype)


def _fused_kernel_mk(x_ref, w_ref, b_ref, r_ref, o_ref, acc_ref, *, compute_dtype):
    """Multi K-step: f32 VMEM accumulator; bias/ReLU/residual epilogue at k==last."""
    k = pl.program_id(2)

    @pl.when(k == 0)
    def _():
        acc_ref[...] = jnp.zeros_like(acc_ref)

    acc_ref[...] += lax.dot_general(
        x_ref[...].astype(compute_dtype),
        w_ref[...].astype(compute_dtype),
        dimension_numbers=(((1,), (1,)), ((), ())),
        preferred_element_type=jnp.float32)

    @pl.when(k == pl.num_programs(2) - 1)
    def _():
        y = jnp.maximum(acc_ref[...] + b_ref[...].astype(jnp.float32), 0.0)
        o_ref[...] = (r_ref[...].astype(jnp.float32) + y).astype(o_ref.dtype)


# -----------------------------------------------------------------------------
# Tile planning
# -----------------------------------------------------------------------------

def _round_up(x, m):
    return (x + m - 1) // m * m


@functools.lru_cache(maxsize=None)
def _vmem_capacity_bytes():
    try:
        return int(pltpu.get_tpu_info().vmem_capacity_bytes)
    except Exception:
        return 64 << 20  # conservative (v7x-sized) fallback


def _footprint_bytes(tm, tn, tk, F_pad, x_b, w_b, o_b, b_b):
    n_k = F_pad // tk
    w_bufs = 3 if n_k >= 3 else 2       # deep-K: weight stream triple-buffered
    f = 2 * tm * tk * x_b               # LHS tiles (double-buffered)
    f += w_bufs * tn * tk * w_b         # weight tiles
    f += 2 * tm * tn * x_b              # residual tiles
    f += 2 * tn * b_b                   # bias tiles
    f += 2 * tm * tn * o_b              # output tiles
    if n_k > 1:
        f += tm * tn * 4                # f32 accumulator scratch
    return f


def _plan_tiles(B_pad, F_pad, x_b, w_b, o_b, b_b, budget, max_tk):
    if B_pad <= 512:
        tm_cands = [B_pad] + [c for c in (256, 128, 64, 32, 16, 8)
                              if c < B_pad and B_pad % c == 0]
    else:
        tm_cands = [c for c in (512, 384, 256, 128) if B_pad % c == 0]
    tn_cands = [c for c in (512, 384, 256, 128) if F_pad % c == 0] or [F_pad]
    tk_cands = [F_pad] + [c for c in (2048, 1024, 512, 256, 128)
                          if c < F_pad and F_pad % c == 0]
    if max_tk is not None:
        tk_cands = [c for c in tk_cands if c <= max_tk] or [128]

    plan = None
    for tk in tk_cands:                 # prefer collapsing K (single K step)
        for tn in tn_cands:             # then large, lane-dense N tiles
            for tm in tm_cands:         # then large M tiles
                if _footprint_bytes(tm, tn, tk, F_pad, x_b, w_b, o_b, b_b) <= budget:
                    plan = (tm, tn, tk)
                    break
            if plan:
                break
        if plan:
            break
    if plan is None:                    # degenerate budget: smallest legal tiles
        plan = (tm_cands[-1], tn_cands[-1], tk_cands[-1])
    tm, tn, tk = plan

    # Ensure >= 2 parallel (i, j) tiles so both v7x TensorCores get work
    # (neutral on 1-TC v5e/v6e).  Prefer splitting N (x re-read is the small
    # stream); only split M when the batch is not tiny.
    if (B_pad // tm) * (F_pad // tn) < 2:
        smaller_tn = [c for c in tn_cands if c < tn]
        smaller_tm = [c for c in tm_cands if c < tm]
        if smaller_tn:
            tn = smaller_tn[0]
        elif smaller_tm and B_pad >= 64:
            tm = smaller_tm[0]
    return tm, tn, tk


# -----------------------------------------------------------------------------
# Public wrapper
# -----------------------------------------------------------------------------

@functools.partial(jax.jit, static_argnames=("compute_dtype", "max_tk"))
def residual_block(x, w, b, *, compute_dtype=None, max_tk=None):
    """Fused  x + relu(x @ w.T + b)  (PyTorch ResidualBlock forward, ReLU).

    x: (B, F); w: (F, F) in nn.Linear (out_features, in_features) layout, used
    directly (no wrapper-side transpose); b: (F,).  Returns (B, F) in x.dtype.
    compute_dtype sets the MXU operand dtype (default bf16 when x is f32);
    accumulation and the bias/ReLU/residual epilogue stay f32.
    """
    B, F = x.shape
    assert w.shape == (F, F), "residual add requires in_features == out_features"
    assert b.shape == (F,)
    if compute_dtype is None:
        compute_dtype = jnp.bfloat16 if x.dtype == jnp.float32 else x.dtype
    compute_dtype = jnp.dtype(compute_dtype)

    F_pad = _round_up(F, 128)
    B_pad = _round_up(B, 8) if B <= 512 else _round_up(B, 128)

    # Pre-cast W only when the weight stream is re-read >= 3 times even at
    # tm = 512 (amortizes the extra HBM pass); otherwise cast tiles in-kernel.
    precast_w = (jnp.dtype(w.dtype) != compute_dtype) and (B_pad > 2 * 512)

    x_b = jnp.dtype(x.dtype).itemsize
    w_b = compute_dtype.itemsize if precast_w else jnp.dtype(w.dtype).itemsize
    o_b = jnp.dtype(x.dtype).itemsize
    bias_b = jnp.dtype(b.dtype).itemsize

    vmem_cap = _vmem_capacity_bytes()
    budget = (vmem_cap * 3) // 4            # ~48 MiB on v7x, ~96 MiB on v5e/v6e
    tm, tn, tk = _plan_tiles(B_pad, F_pad, x_b, w_b, o_b, bias_b, budget, max_tk)
    n_k = F_pad // tk

    # ---- layout prep (no transpose; pad only when shapes are not aligned) ----
    x_p = x if (B_pad == B and F_pad == F) else jnp.pad(
        x, ((0, B_pad - B), (0, F_pad - F)))
    w_p = w if F_pad == F else jnp.pad(w, ((0, F_pad - F), (0, F_pad - F)))
    if precast_w:
        w_p = w_p.astype(compute_dtype)
    b_p = b.reshape(1, F)
    if F_pad != F:
        b_p = jnp.pad(b_p, ((0, 0), (0, F_pad - F)))

    footprint = _footprint_bytes(tm, tn, tk, F_pad, x_b, w_b, o_b, bias_b)
    # Always set an explicit scoped-VMEM limit (v5e default is only 16 MiB).
    vmem_limit = int(min(vmem_cap * 9 // 10,
                         max(footprint * 2 + (8 << 20), 32 << 20)))

    cost = pl.CostEstimate(
        flops=2 * B_pad * F_pad * F_pad,
        transcendentals=0,
        bytes_accessed=int((F_pad // tn) * B_pad * F_pad * x_b      # lhs re-reads
                           + (B_pad // tm) * F_pad * F_pad * w_b    # weight streams
                           + B_pad * F_pad * x_b                    # residual
                           + F_pad * bias_b                         # bias
                           + B_pad * F_pad * o_b))                  # output

    if n_k == 1:
        grid = (B_pad // tm, F_pad // tn)
        in_specs = [
            pl.BlockSpec((tm, tk), lambda i, j: (i, 0)),   # x as matmul LHS
            pl.BlockSpec((tn, tk), lambda i, j: (j, 0)),   # W, native (out, in)
            pl.BlockSpec((1, tn), lambda i, j: (0, j)),    # bias
            pl.BlockSpec((tm, tn), lambda i, j: (i, j)),   # x as residual
        ]
        out_spec = pl.BlockSpec((tm, tn), lambda i, j: (i, j))
        kernel = functools.partial(_fused_kernel_1k, compute_dtype=compute_dtype)
        scratch = []
        semantics = ("parallel", "parallel")
    else:
        grid = (B_pad // tm, F_pad // tn, n_k)
        if n_k >= 3:
            # Deep-K: triple-buffer the dominant (weight) stream.
            w_spec = pl.BlockSpec((tn, tk), lambda i, j, k: (j, k),
                                  pipeline_mode=pl.Buffered(3))
        else:
            w_spec = pl.BlockSpec((tn, tk), lambda i, j, k: (j, k))
        in_specs = [
            pl.BlockSpec((tm, tk), lambda i, j, k: (i, k)),
            w_spec,
            pl.BlockSpec((1, tn), lambda i, j, k: (0, j)),
            pl.BlockSpec((tm, tn), lambda i, j, k: (i, j)),
        ]
        out_spec = pl.BlockSpec((tm, tn), lambda i, j, k: (i, j))
        kernel = functools.partial(_fused_kernel_mk, compute_dtype=compute_dtype)
        scratch = [pltpu.VMEM((tm, tn), jnp.float32)]
        semantics = ("parallel", "parallel", "arbitrary")

    out = pl.pallas_call(
        kernel,
        out_shape=jax.ShapeDtypeStruct((B_pad, F_pad), x.dtype),
        grid=grid,
        in_specs=in_specs,
        out_specs=out_spec,
        scratch_shapes=scratch,
        compiler_params=pltpu.CompilerParams(
            dimension_semantics=semantics,
            vmem_limit_bytes=vmem_limit),
        cost_estimate=cost,
    )(x_p, w_p, b_p, x_p)

    if B_pad != B or F_pad != F:
        out = out[:B, :F]
    return out


def reference(x, w, b, compute_dtype=None):
    """Pure-JAX reference matching the PyTorch forward (ReLU activation)."""
    if compute_dtype is None:
        compute_dtype = jnp.bfloat16 if x.dtype == jnp.float32 else x.dtype
    y = jnp.dot(x.astype(compute_dtype), w.T.astype(compute_dtype),
                preferred_element_type=jnp.float32)
    y = jnp.maximum(y + b.astype(jnp.float32), 0.0)
    return (x.astype(jnp.float32) + y).astype(x.dtype)


if __name__ == "__main__":
    key = jax.random.PRNGKey(0)
    kx, kw, kb = jax.random.split(key, 3)

    # Small, lane-friendly primary shape (single-K-step, 2 parallel j tiles).
    batch, features = 128, 256
    bound = 1.0 / jnp.sqrt(jnp.float32(features))
    x = jax.random.normal(kx, (batch, features), dtype=jnp.float32)
    # nn.Linear layout: weight (out_features, in_features), bias (out_features,)
    w = jax.random.uniform(kw, (features, features), jnp.float32, -bound, bound)
    b = jax.random.uniform(kb, (features,), jnp.float32, -bound, bound)

    # 1) Default path: bf16 MXU operands, f32 accumulation + epilogue.
    out = jax.block_until_ready(residual_block(x, w, b))
    ref = reference(x, w, b)
    assert out.shape == (batch, features)
    assert jnp.allclose(out, ref, atol=2e-2, rtol=2e-2), "bf16 default path mismatch"

    # 2) Explicit f32 MXU operands.
    out_f32 = jax.block_until_ready(residual_block(x, w, b, compute_dtype=jnp.float32))
    ref_f32 = reference(x, w, b, compute_dtype=jnp.float32)
    assert jnp.allclose(out_f32, ref_f32, atol=5e-3, rtol=5e-3), "f32 path mismatch"

    # 3) Odd, non-tile-multiple shape exercising the padding path.
    x2 = jax.random.normal(kx, (10, 96), dtype=jnp.float32)
    bound2 = 1.0 / jnp.sqrt(jnp.float32(96))
    w2 = jax.random.uniform(kw, (96, 96), jnp.float32, -bound2, bound2)
    b2 = jax.random.uniform(kb, (96,), jnp.float32, -bound2, bound2)
    out2 = jax.block_until_ready(residual_block(x2, w2, b2, compute_dtype=jnp.float32))
    ref2 = reference(x2, w2, b2, compute_dtype=jnp.float32)
    assert out2.shape == (10, 96)
    assert jnp.allclose(out2, ref2, atol=5e-3, rtol=5e-3), "padded-path mismatch"

    # 4) Force a multi-K-step grid (accumulator kernel + Buffered(3) weight spec).
    x3 = jax.random.normal(kx, (24, 384), dtype=jnp.float32)
    bound3 = 1.0 / jnp.sqrt(jnp.float32(384))
    w3 = jax.random.uniform(kw, (384, 384), jnp.float32, -bound3, bound3)
    b3 = jax.random.uniform(kb, (384,), jnp.float32, -bound3, bound3)
    out3 = jax.block_until_ready(residual_block(x3, w3, b3, max_tk=128))
    ref3 = reference(x3, w3, b3)
    assert jnp.allclose(out3, ref3, atol=2e-2, rtol=2e-2), "multi-K path mismatch"

    print("KERNEL_OK")
</pallas_src>

<mosaic_0001>
module attributes {stable_mosaic.version = 11 : i64} {
  func.func @_fused_kernel_1k(%arg0: i32, %arg1: i32, %arg2: memref<128x256xf32, #tpu.memory_space<vmem>>, %arg3: memref<128x256xf32, #tpu.memory_space<vmem>>, %arg4: memref<1x128xf32, #tpu.memory_space<vmem>>, %arg5: memref<128x128xf32, #tpu.memory_space<vmem>>, %arg6: memref<128x128xf32, #tpu.memory_space<vmem>>) attributes {dimension_semantics = [#tpu.dimension_semantics<parallel>, #tpu.dimension_semantics<parallel>], iteration_bounds = array<i64: 1, 2>, scalar_prefetch = 0 : i64, scratch_operands = 0 : i64, tpu.core_type = #tpu.core_type<tc>, window_params = [{transform_indices = @transform_0, window_bounds = array<i64: 128, 256>}, {transform_indices = @transform_1, window_bounds = array<i64: 128, 256>}, {transform_indices = @transform_2, window_bounds = array<i64: 1, 128>}, {transform_indices = @transform_3, window_bounds = array<i64: 128, 128>}, {transform_indices = @transform_4, window_bounds = array<i64: 128, 128>}]} {
    %c0 = arith.constant 0 : index
    %c0_0 = arith.constant 0 : index
    %0 = vector.load %arg2[%c0, %c0_0] : memref<128x256xf32, #tpu.memory_space<vmem>>, vector<128x256xf32>
    %1 = arith.truncf %0 : vector<128x256xf32> to vector<128x256xbf16>
    %c0_1 = arith.constant 0 : index
    %c0_2 = arith.constant 0 : index
    %2 = vector.load %arg3[%c0_1, %c0_2] : memref<128x256xf32, #tpu.memory_space<vmem>>, vector<128x256xf32>
    %3 = arith.truncf %2 : vector<128x256xf32> to vector<128x256xbf16>
    %cst = arith.constant dense<0.000000e+00> : vector<128x128xf32>
    %4 = tpu.matmul %1, %3, %cst {dimension_numbers = #tpu.dot_dimension_numbers<[1], [1], [0], [0], [0, 0, 1, 0], [], []>} : vector<128x256xbf16>, vector<128x256xbf16>, vector<128x128xf32> -> vector<128x128xf32>
    %c0_3 = arith.constant 0 : index
    %c0_4 = arith.constant 0 : index
    %5 = vector.load %arg4[%c0_3, %c0_4] : memref<1x128xf32, #tpu.memory_space<vmem>>, vector<1x128xf32>
    %6 = vector.broadcast %5 : vector<1x128xf32> to vector<128x128xf32>
    %7 = arith.addf %4, %6 : vector<128x128xf32>
    %cst_5 = arith.constant 0.000000e+00 : f32
    %8 = vector.broadcast %cst_5 : f32 to vector<128x128xf32>
    %9 = arith.maximumf %7, %8 : vector<128x128xf32>
    %c0_6 = arith.constant 0 : index
    %c0_7 = arith.constant 0 : index
    %10 = vector.load %arg5[%c0_6, %c0_7] : memref<128x128xf32, #tpu.memory_space<vmem>>, vector<128x128xf32>
    %11 = arith.addf %10, %9 : vector<128x128xf32>
    %c0_8 = arith.constant 0 : index
    %c0_9 = arith.constant 0 : index
    %12 = vector.load %arg6[%c0_8, %c0_9] : memref<128x128xf32, #tpu.memory_space<vmem>>, vector<128x128xf32>
    tpu.vector_store %arg6[%c0_8, %c0_9], %11 {strides = array<i32>} : memref<128x128xf32, #tpu.memory_space<vmem>>, vector<128x128xf32>,
    return
  }
  func.func @transform_0(%arg0: i32, %arg1: i32) -> (i32, i32) {
    %c0_i32 = arith.constant 0 : i32
    %c0_i32_0 = arith.constant 0 : i32
    return %arg0, %c0_i32 : i32, i32
  }
  func.func @transform_1(%arg0: i32, %arg1: i32) -> (i32, i32) {
    %c0_i32 = arith.constant 0 : i32
    %c0_i32_0 = arith.constant 0 : i32
    return %arg1, %c0_i32 : i32, i32
  }
  func.func @transform_2(%arg0: i32, %arg1: i32) -> (i32, i32) {
    %c0_i32 = arith.constant 0 : i32
    %c0_i32_0 = arith.constant 0 : i32
    return %c0_i32, %arg1 : i32, i32
  }
  func.func @transform_3(%arg0: i32, %arg1: i32) -> (i32, i32) {
    %c0_i32 = arith.constant 0 : i32
    return %arg0, %arg1 : i32, i32
  }
  func.func @transform_4(%arg0: i32, %arg1: i32) -> (i32, i32) {
    %c0_i32 = arith.constant 0 : i32
    return %arg0, %arg1 : i32, i32
  }
}

</mosaic_0001>

<llo_original>
// kernel: residual_block.1
$region0: #{residual_block.1}
  #allocation0 [shape = 'u32[]', space=smem, size = 0x4, offset = 0x4, fixed_abs, tag = 'smem constant byte address 0x4 - core index']
  #allocation1 [shape = 'u32[144,128]{1,0:T(1,128)}', space=vmem, size = 0x12000, scoped, tag = 'internal scratch']
  %s0 = inlined_call_operand.hbm [shape: f32[128,256], index: 0, kind: input, shape index: {}, may-alias: {0,3}]
  %s1 = inlined_call_operand.hbm [shape: f32[256,256], index: 1, kind: input, shape index: {}]
  %s2 = inlined_call_operand.vmem [shape: f32[1,256], index: 2, kind: input, shape index: {}]
  %s3 = inlined_call_operand.hbm [shape: f32[128,256], index: 3, kind: input, shape index: {}, may-alias: {0,3}]
  %s4 = inlined_call_operand.hbm [shape: f32[128,256], index: 4, kind: output, shape index: {}]
  %s5 = sld [smem:[#allocation0]]
  $region61: #{residual_block.1} parent=0
    _
  %s7 = ssub.s32 1, %s5
  %s8 = scalar_select 0, %s7, %s5
  $region1: #{residual_block.1} parent=0
    #allocation2 [shape = 'u8[131072]{0}', space=vmem, size = 0x20000, scoped, tag = 'input window, operand 0, single buffered']
    #allocation3 [shape = 's32[2]{0}', space=sflag, size = 0x8, scoped, tag = 'scoped memory for residual_block.1']
    #allocation4 [shape = 's32[2]{0}', space=sflag, size = 0x8, scoped, tag = 'scoped memory for residual_block.1']
    #allocation5 [shape = 'u8[262144]{0}', space=vmem, size = 0x40000, scoped, tag = 'input window, operand 1']
    #allocation6 [shape = 's32[2]{0}', space=sflag, size = 0x8, scoped, tag = 'scoped memory for residual_block.1']
    #allocation7 [shape = 'u8[131072]{0}', space=vmem, size = 0x20000, scoped, tag = 'input window, operand 3']
    #allocation8 [shape = 'u8[131072]{0}', space=vmem, size = 0x20000, scoped, tag = 'output window, operand 0']
    %9 = vsyncpa [#allocation3], 0
    %10 = vsyncpa [#allocation6], 0
    %s11 = scalar_lea.sflag [#allocation6], 1
    %12 = vsyncpa %s11, 0
    %13 = vsyncpa [#allocation4], 0
    %s14 = scalar_lea.sflag [#allocation4], 1
    %15 = vsyncpa %s14, 0
    loop: start=0, step=1, limit=4
    $region2: #{residual_block.1} parent=1 // loop_pre_header
      _
    $region3: #{residual_block.1} parent=1 // loop_header
      %s17 = sphi 0, %s21
      %p18 = scmp.ge.s32.totalorder %s17, 4
      %s24 = sphi 0, %s36
      %s25 = sphi 0, %s32
      %s26 = sphi 0, %s24
      %s27 = sphi 0, %s25
      %s28 = sphi 0, %s26
      %s29 = sphi 0, %s27
      %s39 = sphi 0, %s41
      %s42 = sphi 0, %s39
      %s43 = sphi 0, %s42
      %s59 = sphi 0, %s43
      %s65 = sphi 0, %s67
      %s68 = sphi 0, %s65
      %s69 = sphi 0, %s68
      %s85 = sphi 0, %s69
      %s91 = sphi 0, %s93
      %s94 = sphi 0, %s91
      %s95 = sphi 0, %s94
      %s111 = sphi 0, %s95
      %s119 = sphi 0, %s121
      %s122 = sphi 0, %s119
      %s123 = sphi 0, %s122
      %s139 = sphi 0, %s123
      %s147 = sphi 0, %s149
      %s150 = sphi 0, %s147
      %s151 = sphi 0, %s150
      %s167 = sphi 0, %s151
    $region4: #{residual_block.1} parent=1 // loop_header_branch
      %20 = sbr.rel (%p18) target = $region8
    $region5: #{residual_block.1} parent=1 // loop_body
      %s22 = ssub.s32 %s17, 1
      %s23 = ssub.s32 %s17, 2
      %s30 = sadd.s32 1, %s25
      %p31 = scmp.ge.s32.totalorder %s30, 2
      %s32 = scalar_select %p31, 0, %s30
      %s33 = sadd.s32 1, %s24
      %s34 = scalar_select %p31, %s33, %s24
      %p35 = scmp.ge.s32.totalorder %s34, 1
      %s36 = scalar_select %p35, 0, %s34
      %s37 = ssub.s32 %s24, %s36
      %p38 = scmp.eq.s32.totalorder %s37, 0
      %s40 = sadd.s32 %s39, 1
      %s41 = scalar_select %p38, %s39, %s40
      %p44 = pneg %p38
      %p45 = scmp.eq.s32.totalorder %s17, 1
      %p46 = por %p44, %p45
      %p47 = scmp.ne.s32.totalorder %s39, %s42
      %p48 = scmp.eq.s32.totalorder %s17, 0
      %p49 = por %p47, %p48
      %p50 = scmp.ne.s32.totalorder %s39, %s42
      %p51 = scmp.eq.s32.totalorder %s22, 1
      %p52 = por %p50, %p51
      %p53 = scmp.ne.s32.totalorder %s42, %s43
      %p54 = scmp.eq.s32.totalorder %s22, 0
      %p55 = por %p53, %p54
      %p56 = scmp.ne.s32.totalorder %s42, %s43
      %p57 = scmp.eq.s32.totalorder %s23, 1
      %p58 = por %p56, %p57
      %p60 = scmp.ne.s32.totalorder %s43, %s59
      %p61 = scmp.eq.s32.totalorder %s23, 0
      %p62 = por %p60, %p61
      %s63 = ssub.s32 %s25, %s32
      %p64 = scmp.eq.s32.totalorder %s63, 0
      %s66 = sadd.s32 %s65, 1
      %s67 = scalar_select %p64, %s65, %s66
      %p70 = pneg %p64
      %p71 = scmp.eq.s32.totalorder %s17, 1
      %p72 = por %p70, %p71
      %p73 = scmp.ne.s32.totalorder %s65, %s68
      %p74 = scmp.eq.s32.totalorder %s17, 0
      %p75 = por %p73, %p74
      %p76 = scmp.ne.s32.totalorder %s65, %s68
      %p77 = scmp.eq.s32.totalorder %s22, 1
      %p78 = por %p76, %p77
      %p79 = scmp.ne.s32.totalorder %s68, %s69
      %p80 = scmp.eq.s32.totalorder %s22, 0
      %p81 = por %p79, %p80
      %p82 = scmp.ne.s32.totalorder %s68, %s69
      %p83 = scmp.eq.s32.totalorder %s23, 1
      %p84 = por %p82, %p83
      %p86 = scmp.ne.s32.totalorder %s69, %s85
      %p87 = scmp.eq.s32.totalorder %s23, 0
      %p88 = por %p86, %p87
      %s89 = ssub.s32 %s25, %s32
      %p90 = scmp.eq.s32.totalorder %s89, 0
      %s92 = sadd.s32 %s91, 1
      %s93 = scalar_select %p90, %s91, %s92
      %p96 = pneg %p90
      %p97 = scmp.eq.s32.totalorder %s17, 1
      %p98 = por %p96, %p97
      %p99 = scmp.ne.s32.totalorder %s91, %s94
      %p100 = scmp.eq.s32.totalorder %s17, 0
      %p101 = por %p99, %p100
      %p102 = scmp.ne.s32.totalorder %s91, %s94
      %p103 = scmp.eq.s32.totalorder %s22, 1
      %p104 = por %p102, %p103
      %p105 = scmp.ne.s32.totalorder %s94, %s95
      %p106 = scmp.eq.s32.totalorder %s22, 0
      %p107 = por %p105, %p106
      %p108 = scmp.ne.s32.totalorder %s94, %s95
      %p109 = scmp.eq.s32.totalorder %s23, 1
      %p110 = por %p108, %p109
      %p112 = scmp.ne.s32.totalorder %s95, %s111
      %p113 = scmp.eq.s32.totalorder %s23, 0
      %p114 = por %p112, %p113
      %s115 = ssub.s32 %s24, %s36
      %s116 = ssub.s32 %s25, %s32
      %s117 = sor.u32 %s115, %s116
      %p118 = scmp.eq.s32.totalorder %s117, 0
      %s120 = sadd.s32 %s119, 1
      %s121 = scalar_select %p118, %s119, %s120
      %p124 = pneg %p118
      %p125 = scmp.eq.s32.totalorder %s17, 1
      %p126 = por %p124, %p125
      %p127 = scmp.ne.s32.totalorder %s119, %s122
      %p128 = scmp.eq.s32.totalorder %s17, 0
      %p129 = por %p127, %p128
      %p130 = scmp.ne.s32.totalorder %s119, %s122
      %p131 = scmp.eq.s32.totalorder %s22, 1
      %p132 = por %p130, %p131
      %p133 = scmp.ne.s32.totalorder %s122, %s123
      %p134 = scmp.eq.s32.totalorder %s22, 0
      %p135 = por %p133, %p134
      %p136 = scmp.ne.s32.totalorder %s122, %s123
      %p137 = scmp.eq.s32.totalorder %s23, 1
      %p138 = por %p136, %p137
      %p140 = scmp.ne.s32.totalorder %s123, %s139
      %p141 = scmp.eq.s32.totalorder %s23, 0
      %p142 = por %p140, %p141
      %s143 = ssub.s32 %s24, %s36
      %s144 = ssub.s32 %s25, %s32
      %s145 = sor.u32 %s143, %s144
      %p146 = scmp.eq.s32.totalorder %s145, 0
      %s148 = sadd.s32 %s147, 1
      %s149 = scalar_select %p146, %s147, %s148
      %p152 = pneg %p146
      %p153 = scmp.eq.s32.totalorder %s17, 1
      %p154 = por %p152, %p153
      %p155 = scmp.ne.s32.totalorder %s147, %s150
      %p156 = scmp.eq.s32.totalorder %s17, 0
      %p157 = por %p155, %p156
      %p158 = scmp.ne.s32.totalorder %s147, %s150
      %p159 = scmp.eq.s32.totalorder %s22, 1
      %p160 = por %p158, %p159
      %p161 = scmp.ne.s32.totalorder %s150, %s151
      %p162 = scmp.eq.s32.totalorder %s22, 0
      %p163 = por %p161, %p162
      %p164 = scmp.ne.s32.totalorder %s150, %s151
      %p165 = scmp.eq.s32.totalorder %s23, 1
      %p166 = por %p164, %p165
      %p168 = scmp.ne.s32.totalorder %s151, %s167
      %p169 = scmp.eq.s32.totalorder %s23, 0
      %p170 = por %p168, %p169
      %p171 = scmp.le.s32.totalorder 1, %s17
      %p172 = scmp.lt.s32.totalorder %s17, 3
      %p173 = pnand %p171, %p172
      %p174 = pneg %p173
      // Predicated region
      $region9: #{residual_block.1} parent=5 // pred_check
        _
      $region10: #{residual_block.1} parent=5 // pred_check_branch
        %176 = sbr.rel (%p173) target = $region12
      $region11: #{residual_block.1} parent=5 // pred_region
        %s177 = ssub.s32 %s17, 1
        // Predicated region
        $region13: #{residual_block.1} parent=11 // pred_check
          %p178 = pneg %p55
        $region14: #{residual_block.1} parent=11 // pred_check_branch
          %180 = sbr.rel (%p178) target = $region16
        $region15: #{residual_block.1} parent=11 // pred_region
          %s181 = smul.u32 16, %s26
          %s183 = ssub.s32 4096, 4096
          %184 = vsyncadd [#allocation3], %s183
          %s185 = smul.addr %s181, 2
          %s186 = smul.addr %s185, 128
          %s187 = scalar_lea.hbm %s0, %s186
          %s188 = sshll.u32 [#allocation2], 4
          %s189 = int_to_ptr.vmem [resolvable:$true] %s188
          %194 = dma.hbm_to_vmem [thread:$0]  %s187, 4096, %s189, [#allocation3], 256, 256, 16
        $region16: #{residual_block.1} parent=11 // pred_fallthru
          _
      $region12: #{residual_block.1} parent=5 // pred_fallthru
        _
      %p195 = scmp.lt.s32.totalorder %s17, 2
      // Predicated region
      $region17: #{residual_block.1} parent=5 // pred_check
        %p196 = pneg %p195
      $region18: #{residual_block.1} parent=5 // pred_check_branch
        %198 = sbr.rel (%p196) target = $region20
      $region19: #{residual_block.1} parent=5 // pred_region
        // Predicated region
        $region21: #{residual_block.1} parent=19 // pred_check
          %p199 = pneg %p75
        $region22: #{residual_block.1} parent=19 // pred_check_branch
          %201 = sbr.rel (%p199) target = $region24
        $region23: #{residual_block.1} parent=19 // pred_region
          %s202 = sand.u32 %s17, 1
          %s203 = scalar_lea.sflag [#allocation6], %s202
          %s204 = sand.u32 %s65, 1
          %s205 = smul.addr %s204, 256
          %s206 = scalar_lea.vmem [#allocation5], %s205
          %s207 = smul.u32 16, %s25
          %s209 = ssub.s32 4096, 4096
          %210 = vsyncadd %s203, %s209
          %s211 = smul.addr %s207, 2
          %s212 = smul.addr %s211, 128
          %s213 = scalar_lea.hbm %s1, %s212
          %s214 = sshll.u32 %s206, 4
          %s215 = int_to_ptr.vmem [resolvable:$true] %s214
          %220 = dma.hbm_to_vmem [thread:$0]  %s213, 4096, %s215, %s203, 256, 256, 16
        $region24: #{residual_block.1} parent=19 // pred_fallthru
          _
        // Predicated region
        $region25: #{residual_block.1} parent=19 // pred_check
          %p221 = pneg %p101
        $region26: #{residual_block.1} parent=19 // pred_check_branch
          %223 = sbr.rel (%p221) target = $region28
        $region27: #{residual_block.1} parent=19 // pred_region
          %p224 = scmp.lt.s32.totalorder %s25, 1
          %s225 = scalar_select %p224, %s25, 1
          %s226 = scalar_lea.vmem %s2, %s225
        $region28: #{residual_block.1} parent=19 // pred_fallthru
          _
        // Predicated region
        $region29: #{residual_block.1} parent=19 // pred_check
          %p227 = pneg %p129
        $region30: #{residual_block.1} parent=19 // pred_check_branch
          %229 = sbr.rel (%p227) target = $region32
        $region31: #{residual_block.1} parent=19 // pred_region
          %s230 = sand.u32 %s17, 1
          %s231 = scalar_lea.sflag [#allocation6], %s230
          %s232 = sand.u32 %s119, 1
          %s233 = smul.addr %s232, 128
          %s234 = scalar_lea.vmem [#allocation7], %s233
          %s235 = smul.u32 16, %s24
          %s237 = ssub.s32 2048, 2048
          %238 = vsyncadd %s231, %s237
          %s239 = smul.addr %s235, 2
          %s240 = sadd.s32 %s25, %s239
          %s241 = smul.addr %s240, 128
          %s242 = scalar_lea.hbm %s3, %s241
          %s243 = sshll.u32 %s234, 4
          %s244 = int_to_ptr.vmem [resolvable:$true] %s243
          %249 = dma.hbm_to_vmem [thread:$0]  %s242, 2048, %s244, %s231, 256, 128, 8
        $region32: #{residual_block.1} parent=19 // pred_fallthru
          _
      $region20: #{residual_block.1} parent=5 // pred_fallthru
        _
      %p250 = scmp.le.s32.totalorder 1, %s17
      %p251 = scmp.lt.s32.totalorder %s17, 3
      %p252 = pnand %p250, %p251
      %p253 = pneg %p252
      // Predicated region
      $region33: #{residual_block.1} parent=5 // pred_check
        _
      $region34: #{residual_block.1} parent=5 // pred_check_branch
        %255 = sbr.rel (%p252) target = $region36
      $region35: #{residual_block.1} parent=5 // pred_region
        %s256 = ssub.s32 %s17, 1
        // Predicated region
        $region37: #{residual_block.1} parent=35 // pred_check
          %p257 = pneg %p55
        $region38: #{residual_block.1} parent=35 // pred_check_branch
          %259 = sbr.rel (%p257) target = $region40
        $region39: #{residual_block.1} parent=35 // pred_region
          %260 = dma.done [#allocation3], 4096
        $region40: #{residual_block.1} parent=35 // pred_fallthru
          _
        %s261 = sand.u32 %s22, 1
        %s262 = scalar_lea.sflag [#allocation6], %s261
        %s263 = sand.u32 %s68, 1
        %s264 = smul.addr %s263, 256
        %s265 = scalar_lea.vmem [#allocation5], %s264
        // Predicated region
        $region41: #{residual_block.1} parent=35 // pred_check
          %p266 = pneg %p81
        $region42: #{residual_block.1} parent=35 // pred_check_branch
          %268 = sbr.rel (%p266) target = $region44
        $region43: #{residual_block.1} parent=35 // pred_region
          %269 = dma.done %s262, 4096
        $region44: #{residual_block.1} parent=35 // pred_fallthru
          _
        %s270 = sand.u32 %s22, 1
        %s271 = scalar_lea.sflag [#allocation6], %s270
        %s272 = sand.u32 %s122, 1
        %s273 = smul.addr %s272, 128
        %s274 = scalar_lea.vmem [#allocation7], %s273
        // Predicated region
        $region45: #{residual_block.1} parent=35 // pred_check
          %p275 = pneg %p135
        $region46: #{residual_block.1} parent=35 // pred_check_branch
          %277 = sbr.rel (%p275) target = $region48
        $region47: #{residual_block.1} parent=35 // pred_region
          %278 = dma.done %s271, 2048
        $region48: #{residual_block.1} parent=35 // pred_fallthru
          _
        %p279 = pneg %p55
        %p280 = pneg %p52
        %s281 = sand.u32 %s22, 1
        %s282 = scalar_lea.sflag [#allocation6], %s281
        %s283 = sand.u32 %s68, 1
        %s284 = smul.addr %s283, 256
        %s285 = scalar_lea.vmem [#allocation5], %s284
        %p286 = pneg %p81
        %p287 = pneg %p78
        %p288 = scmp.lt.s32.totalorder %s27, 1
        %s289 = scalar_select %p288, %s27, 1
        %s290 = scalar_lea.vmem %s2, %s289
        %p291 = pneg %p107
        %p292 = pneg %p104
        %s293 = sand.u32 %s22, 1
        %s294 = scalar_lea.sflag [#allocation6], %s293
        %s295 = sand.u32 %s122, 1
        %s296 = smul.addr %s295, 128
        %s297 = scalar_lea.vmem [#allocation7], %s296
        %p298 = pneg %p135
        %p299 = pneg %p132
        %p300 = pneg %p163
        %p301 = pneg %p160
        %s302 = sand.u32 %s150, 1
        %s303 = scalar_lea.sflag [#allocation4], %s302
        %s304 = sand.u32 %s150, 1
        %s305 = smul.addr %s304, 128
        %s306 = scalar_lea.vmem [#allocation8], %s305
        %s307 = smul.u32 16, %s26
        %s308 = smul.u32 16, %s27
        %p309 = scmp.lt.s32.totalorder %s27, 1
        %s310 = scalar_select %p309, %s27, 1
        %s311 = scalar_lea.vmem %s2, %s310
        %s312 = smul.u32 16, %s26
        %s313 = smul.u32 16, %s26
        %v315 = vld [vmem:[#allocation2] sm:$0xff]
        %v316 = vld [vmem:[#allocation2 + $0x8] sm:$0xff]
        %v317 = vld [vmem:[#allocation2 + $0x10] sm:$0xff]
        %v318 = vld [vmem:[#allocation2 + $0x18] sm:$0xff]
        %v319 = vld [vmem:[#allocation2 + $0x20] sm:$0xff]
        %v320 = vld [vmem:[#allocation2 + $0x28] sm:$0xff]
        %v321 = vld [vmem:[#allocation2 + $0x30] sm:$0xff]
        %v322 = vld [vmem:[#allocation2 + $0x38] sm:$0xff]
        %v323 = vld [vmem:[#allocation2 + $0x40] sm:$0xff]
        %v324 = vld [vmem:[#allocation2 + $0x48] sm:$0xff]
        %v325 = vld [vmem:[#allocation2 + $0x50] sm:$0xff]
        %v326 = vld [vmem:[#allocation2 + $0x58] sm:$0xff]
        %v327 = vld [vmem:[#allocation2 + $0x60] sm:$0xff]
        %v328 = vld [vmem:[#allocation2 + $0x68] sm:$0xff]
        %v329 = vld [vmem:[#allocation2 + $0x70] sm:$0xff]
        %v330 = vld [vmem:[#allocation2 + $0x78] sm:$0xff]
        %v331 = vld [vmem:[#allocation2 + $0x80] sm:$0xff]
        %v332 = vld [vmem:[#allocation2 + $0x88] sm:$0xff]
        %v333 = vld [vmem:[#allocation2 + $0x90] sm:$0xff]
        %v334 = vld [vmem:[#allocation2 + $0x98] sm:$0xff]
        %v335 = vld [vmem:[#allocation2 + $0xa0] sm:$0xff]
        %v336 = vld [vmem:[#allocation2 + $0xa8] sm:$0xff]
        %v337 = vld [vmem:[#allocation2 + $0xb0] sm:$0xff]
        %v338 = vld [vmem:[#allocation2 + $0xb8] sm:$0xff]
        %v339 = vld [vmem:[#allocation2 + $0xc0] sm:$0xff]
        %v340 = vld [vmem:[#allocation2 + $0xc8] sm:$0xff]
        %v341 = vld [vmem:[#allocation2 + $0xd0] sm:$0xff]
        %v342 = vld [vmem:[#allocation2 + $0xd8] sm:$0xff]
        %v343 = vld [vmem:[#allocation2 + $0xe0] sm:$0xff]
        %v344 = vld [vmem:[#allocation2 + $0xe8] sm:$0xff]
        %v345 = vld [vmem:[#allocation2 + $0xf0] sm:$0xff]
        %v346 = vld [vmem:[#allocation2 + $0xf8] sm:$0xff]
        %v347 = vpack.c.bf16 %v317, %v315
        %v348 = vpack.c.bf16 %v318, %v316
        %v349 = vpack.c.bf16 %v321, %v319
        %v350 = vpack.c.bf16 %v322, %v320
        %v351 = vpack.c.bf16 %v325, %v323
        %v352 = vpack.c.bf16 %v326, %v324
        %v353 = vpack.c.bf16 %v329, %v327
        %v354 = vpack.c.bf16 %v330, %v328
        %v355 = vpack.c.bf16 %v333, %v331
        %v356 = vpack.c.bf16 %v334, %v332
        %v357 = vpack.c.bf16 %v337, %v335
        %v358 = vpack.c.bf16 %v338, %v336
        %v359 = vpack.c.bf16 %v341, %v339
        %v360 = vpack.c.bf16 %v342, %v340
        %v361 = vpack.c.bf16 %v345, %v343
        %v362 = vpack.c.bf16 %v346, %v344
        %v363 = vld [vmem:[%s265] sm:$0xff]
        %v364 = vld [vmem:[%s265 + $0x8] sm:$0xff]
        %v365 = vld [vmem:[%s265 + $0x10] sm:$0xff]
        %v366 = vld [vmem:[%s265 + $0x18] sm:$0xff]
        %v367 = vld [vmem:[%s265 + $0x20] sm:$0xff]
        %v368 = vld [vmem:[%s265 + $0x28] sm:$0xff]
        %v369 = vld [vmem:[%s265 + $0x30] sm:$0xff]
        %v370 = vld [vmem:[%s265 + $0x38] sm:$0xff]
        %v371 = vld [vmem:[%s265 + $0x40] sm:$0xff]
        %v372 = vld [vmem:[%s265 + $0x48] sm:$0xff]
        %v373 = vld [vmem:[%s265 + $0x50] sm:$0xff]
        %v374 = vld [vmem:[%s265 + $0x58] sm:$0xff]
        %v375 = vld [vmem:[%s265 + $0x60] sm:$0xff]
        %v376 = vld [vmem:[%s265 + $0x68] sm:$0xff]
        %v377 = vld [vmem:[%s265 + $0x70] sm:$0xff]
        %v378 = vld [vmem:[%s265 + $0x78] sm:$0xff]
        %v379 = vld [vmem:[%s265 + $0x80] sm:$0xff]
        %v380 = vld [vmem:[%s265 + $0x88] sm:$0xff]
        %v381 = vld [vmem:[%s265 + $0x90] sm:$0xff]
        %v382 = vld [vmem:[%s265 + $0x98] sm:$0xff]
        %v383 = vld [vmem:[%s265 + $0xa0] sm:$0xff]
        %v384 = vld [vmem:[%s265 + $0xa8] sm:$0xff]
        %v385 = vld [vmem:[%s265 + $0xb0] sm:$0xff]
        %v386 = vld [vmem:[%s265 + $0xb8] sm:$0xff]
        %v387 = vld [vmem:[%s265 + $0xc0] sm:$0xff]
        %v388 = vld [vmem:[%s265 + $0xc8] sm:$0xff]
        %v389 = vld [vmem:[%s265 + $0xd0] sm:$0xff]
        %v390 = vld [vmem:[%s265 + $0xd8] sm:$0xff]
        %v391 = vld [vmem:[%s265 + $0xe0] sm:$0xff]
        %v392 = vld [vmem:[%s265 + $0xe8] sm:$0xff]
        %v393 = vld [vmem:[%s265 + $0xf0] sm:$0xff]
        %v394 = vld [vmem:[%s265 + $0xf8] sm:$0xff]
        %v395 = vpack.c.bf16 %v365, %v363
        %v396 = vpack.c.bf16 %v366, %v364
        %v397 = vpack.c.bf16 %v369, %v367
        %v398 = vpack.c.bf16 %v370, %v368
        %v399 = vpack.c.bf16 %v373, %v371
        %v400 = vpack.c.bf16 %v374, %v372
        %v401 = vpack.c.bf16 %v377, %v375
        %v402 = vpack.c.bf16 %v378, %v376
        %v403 = vpack.c.bf16 %v381, %v379
        %v404 = vpack.c.bf16 %v382, %v380
        %v405 = vpack.c.bf16 %v385, %v383
        %v406 = vpack.c.bf16 %v386, %v384
        %v407 = vpack.c.bf16 %v389, %v387
        %v408 = vpack.c.bf16 %v390, %v388
        %v409 = vpack.c.bf16 %v393, %v391
        %v410 = vpack.c.bf16 %v394, %v392
        %v411 = vld [vmem:[%s311] sm:$0x1]
        %v413 = vlaneseq
        %v414 = vshrl.u32 %v413, 7
        %v415 = vsub.s32 0, %v414
        %v416 = vrot.slane %v411, %v415
        %418 = vmatprep.subr.bf16.mxu0 %v396
        %419 = vmatpush1.bf16.xpose.msra.mxu0 %v395
        %420 = vmatprep.subr.bf16.mxu0 %v398
        %421 = vmatpush1.bf16.xpose.msra.mxu0 %v397
        %422 = vmatprep.subr.bf16.mxu0 %v400
        %423 = vmatpush1.bf16.xpose.msra.mxu0 %v399
        %424 = vmatprep.subr.bf16.mxu0 %v402
        %425 = vmatpush1.bf16.xpose.msra.mxu0 %v401
        %426 = vmatprep.subr.bf16.mxu0 %v404
        %427 = vmatpush1.bf16.xpose.msra.mxu0 %v403
        %428 = vmatprep.subr.bf16.mxu0 %v406
        %429 = vmatpush1.bf16.xpose.msra.mxu0 %v405
        %430 = vmatprep.subr.bf16.mxu0 %v408
        %431 = vmatpush1.bf16.xpose.msra.mxu0 %v407
        %432 = vmatprep.subr.bf16.mxu0 %v410
        %433 = vmatpush1.bf16.xpose.msra.mxu0 %v409
        %434 = vmatprep.subr.bf16.mxu0 0
        %435 = vmatpush1.bf16.xpose.msra.mxu0 0
        %436 = vmatprep.subr.bf16.mxu0 0
        %437 = vmatpush1.bf16.xpose.msra.mxu0 0
        %438 = vmatprep.subr.bf16.mxu0 0
        %439 = vmatpush1.bf16.xpose.msra.mxu0 0
        %440 = vmatprep.subr.bf16.mxu0 0
        %441 = vmatpush1.bf16.xpose.msra.mxu0 0
        %442 = vmatprep.subr.bf16.mxu0 0
        %443 = vmatpush1.bf16.xpose.msra.mxu0 0
        %444 = vmatprep.subr.bf16.mxu0 0
        %445 = vmatpush1.bf16.xpose.msra.mxu0 0
        %446 = vmatprep.subr.bf16.mxu0 0
        %447 = vmatpush1.bf16.xpose.msra.mxu0 0
        %448 = vmatprep.subr.bf16.mxu0 0
        %449 = vmatpush1.bf16.xpose.msra.mxu0 0
        %450 = vmatprep.mubr.bf16.mxu0 %v348
        %451 = vmatmul.mubr.bf16.gmra.mrb[0].mxu0 %v347
        %v452 = vpop.f32.mrb[0].mxu0
        %v453 = vadd.f32 %v416, %v452
        %v454 = vpop.f32.mrb[0].mxu0
        %v455 = vpop.f32.mrb[0].mxu0
        %v456 = vadd.f32 %v416, %v455
        %v457 = vpop.f32.mrb[0].mxu0
        %458 = vmatprep.mubr.bf16.mxu0 %v350
        %459 = vmatmul.mubr.bf16.gmra.mrb[0].mxu0 %v349
        %v460 = vpop.f32.mrb[0].mxu0
        %v461 = vadd.f32 %v416, %v460
        %v462 = vpop.f32.mrb[0].mxu0
        %v463 = vpop.f32.mrb[0].mxu0
        %v464 = vadd.f32 %v416, %v463
        %v465 = vpop.f32.mrb[0].mxu0
        %466 = vmatprep.mubr.bf16.mxu0 %v352
        %467 = vmatmul.mubr.bf16.gmra.mrb[0].mxu0 %v351
        %v468 = vpop.f32.mrb[0].mxu0
        %v469 = vadd.f32 %v416, %v468
        %v470 = vpop.f32.mrb[0].mxu0
        %v471 = vpop.f32.mrb[0].mxu0
        %v472 = vadd.f32 %v416, %v471
        %v473 = vpop.f32.mrb[0].mxu0
        %474 = vmatprep.mubr.bf16.mxu0 %v354
        %475 = vmatmul.mubr.bf16.gmra.mrb[0].mxu0 %v353
        %v476 = vpop.f32.mrb[0].mxu0
        %v477 = vadd.f32 %v416, %v476
        %v478 = vpop.f32.mrb[0].mxu0
        %v479 = vpop.f32.mrb[0].mxu0
        %v480 = vadd.f32 %v416, %v479
        %v481 = vpop.f32.mrb[0].mxu0
        %482 = vmatprep.mubr.bf16.mxu0 %v356
        %483 = vmatmul.mubr.bf16.gmra.mrb[0].mxu0 %v355
        %v484 = vpop.f32.mrb[0].mxu0
        %v485 = vadd.f32 %v416, %v484
        %v486 = vpop.f32.mrb[0].mxu0
        %v487 = vpop.f32.mrb[0].mxu0
        %v488 = vadd.f32 %v416, %v487
        %v489 = vpop.f32.mrb[0].mxu0
        %490 = vmatprep.mubr.bf16.mxu0 %v358
        %491 = vmatmul.mubr.bf16.gmra.mrb[0].mxu0 %v357
        %v492 = vpop.f32.mrb[0].mxu0
        %v493 = vadd.f32 %v416, %v492
        %v494 = vpop.f32.mrb[0].mxu0
        %v495 = vpop.f32.mrb[0].mxu0
        %v496 = vadd.f32 %v416, %v495
        %v497 = vpop.f32.mrb[0].mxu0
        %498 = vmatprep.mubr.bf16.mxu0 %v360
        %499 = vmatmul.mubr.bf16.gmra.mrb[0].mxu0 %v359
        %v500 = vpop.f32.mrb[0].mxu0
        %v501 = vadd.f32 %v416, %v500
        %v502 = vpop.f32.mrb[0].mxu0
        %v503 = vpop.f32.mrb[0].mxu0
        %v504 = vadd.f32 %v416, %v503
        %v505 = vpop.f32.mrb[0].mxu0
        %506 = vmatprep.mubr.bf16.mxu0 %v362
        %507 = vmatmul.mubr.bf16.gmra.mrb[0].mxu0 %v361
        %v508 = vpop.f32.mrb[0].mxu0
        %v509 = vadd.f32 %v416, %v508
        %v510 = vpop.f32.mrb[0].mxu0
        %v511 = vpop.f32.mrb[0].mxu0
        %v512 = vadd.f32 %v416, %v511
        %v513 = vpop.f32.mrb[0].mxu0
        %514 = vdwg.mxu0
        %v515 = vmax.f32 %v453, 0.0
        %v516 = vmax.f32 %v456, 0.0
        %v517 = vmax.f32 %v461, 0.0
        %v518 = vmax.f32 %v464, 0.0
        %v519 = vmax.f32 %v469, 0.0
        %v520 = vmax.f32 %v472, 0.0
        %v521 = vmax.f32 %v477, 0.0
        %v522 = vmax.f32 %v480, 0.0
        %v523 = vmax.f32 %v485, 0.0
        %v524 = vmax.f32 %v488, 0.0
        %v525 = vmax.f32 %v493, 0.0
        %v526 = vmax.f32 %v496, 0.0
        %v527 = vmax.f32 %v501, 0.0
        %v528 = vmax.f32 %v504, 0.0
        %v529 = vmax.f32 %v509, 0.0
        %v530 = vmax.f32 %v512, 0.0
        %v531 = vld [vmem:[%s274] sm:$0xff]
        %v532 = vld [vmem:[%s274 + $0x8] sm:$0xff]
        %v533 = vld [vmem:[%s274 + $0x10] sm:$0xff]
        %v534 = vld [vmem:[%s274 + $0x18] sm:$0xff]
        %v535 = vld [vmem:[%s274 + $0x20] sm:$0xff]
        %v536 = vld [vmem:[%s274 + $0x28] sm:$0xff]
        %v537 = vld [vmem:[%s274 + $0x30] sm:$0xff]
        %v538 = vld [vmem:[%s274 + $0x38] sm:$0xff]
        %v539 = vld [vmem:[%s274 + $0x40] sm:$0xff]
        %v540 = vld [vmem:[%s274 + $0x48] sm:$0xff]
        %v541 = vld [vmem:[%s274 + $0x50] sm:$0xff]
        %v542 = vld [vmem:[%s274 + $0x58] sm:$0xff]
        %v543 = vld [vmem:[%s274 + $0x60] sm:$0xff]
        %v544 = vld [vmem:[%s274 + $0x68] sm:$0xff]
        %v545 = vld [vmem:[%s274 + $0x70] sm:$0xff]
        %v546 = vld [vmem:[%s274 + $0x78] sm:$0xff]
        %v547 = vadd.f32 %v531, %v515
        %v548 = vadd.f32 %v532, %v516
        %v549 = vadd.f32 %v533, %v517
        %v550 = vadd.f32 %v534, %v518
        %v551 = vadd.f32 %v535, %v519
        %v552 = vadd.f32 %v536, %v520
        %v553 = vadd.f32 %v537, %v521
        %v554 = vadd.f32 %v538, %v522
        %v555 = vadd.f32 %v539, %v523
        %v556 = vadd.f32 %v540, %v524
        %v557 = vadd.f32 %v541, %v525
        %v558 = vadd.f32 %v542, %v526
        %v559 = vadd.f32 %v543, %v527
        %v560 = vadd.f32 %v544, %v528
        %v561 = vadd.f32 %v545, %v529
        %v562 = vadd.f32 %v546, %v530
        %563 = vst [vmem:[%s306] sm:$0xff] %v547
        %564 = vst [vmem:[%s306 + $0x8] sm:$0xff] %v548
        %565 = vst [vmem:[%s306 + $0x10] sm:$0xff] %v549
        %566 = vst [vmem:[%s306 + $0x18] sm:$0xff] %v550
        %567 = vst [vmem:[%s306 + $0x20] sm:$0xff] %v551
        %568 = vst [vmem:[%s306 + $0x28] sm:$0xff] %v552
        %569 = vst [vmem:[%s306 + $0x30] sm:$0xff] %v553
        %570 = vst [vmem:[%s306 + $0x38] sm:$0xff] %v554
        %571 = vst [vmem:[%s306 + $0x40] sm:$0xff] %v555
        %572 = vst [vmem:[%s306 + $0x48] sm:$0xff] %v556
        %573 = vst [vmem:[%s306 + $0x50] sm:$0xff] %v557
        %574 = vst [vmem:[%s306 + $0x58] sm:$0xff] %v558
        %575 = vst [vmem:[%s306 + $0x60] sm:$0xff] %v559
        %576 = vst [vmem:[%s306 + $0x68] sm:$0xff] %v560
        %577 = vst [vmem:[%s306 + $0x70] sm:$0xff] %v561
        %578 = vst [vmem:[%s306 + $0x78] sm:$0xff] %v562
        %s579 = sand.u32 %s150, 1
        %s580 = scalar_lea.sflag [#allocation4], %s579
        %s581 = sand.u32 %s150, 1
        %s582 = smul.addr %s581, 128
        %s583 = scalar_lea.vmem [#allocation8], %s582
        // Predicated region
        $region49: #{residual_block.1} parent=35 // pred_check
          %p584 = pneg %p160
        $region50: #{residual_block.1} parent=35 // pred_check_branch
          %586 = sbr.rel (%p584) target = $region52
        $region51: #{residual_block.1} parent=35 // pred_region
          %s587 = smul.u32 16, %s26
          %s589 = ssub.s32 2048, 2048
          %590 = vsyncadd %s580, %s589
          %s591 = smul.addr %s587, 2
          %s592 = sadd.s32 %s27, %s591
          %s593 = smul.addr %s592, 128
          %s594 = scalar_lea.hbm %s4, %s593
          %s595 = sshll.u32 %s583, 4
          %s596 = int_to_ptr.vmem [resolvable:$true] %s595
          %601 = dma.vmem_to_hbm [thread:$0]  %s596, 2048, %s594, %s580, 128, 256, 8
        $region52: #{residual_block.1} parent=35 // pred_fallthru
          _
      $region36: #{residual_block.1} parent=5 // pred_fallthru
        _
      %p602 = scmp.le.s32.totalorder 2, %s17
      // Predicated region
      $region53: #{residual_block.1} parent=5 // pred_check
        %p603 = pneg %p602
      $region54: #{residual_block.1} parent=5 // pred_check_branch
        %605 = sbr.rel (%p603) target = $region56
      $region55: #{residual_block.1} parent=5 // pred_region
        %s606 = ssub.s32 %s17, 2
        // Predicated region
        $region57: #{residual_block.1} parent=55 // pred_check
          %p607 = pneg %p166
        $region58: #{residual_block.1} parent=55 // pred_check_branch
          %609 = sbr.rel (%p607) target = $region60
        $region59: #{residual_block.1} parent=55 // pred_region
          %s610 = sand.u32 %s151, 1
          %s611 = scalar_lea.sflag [#allocation4], %s610
          %s612 = sand.u32 %s151, 1
          %s613 = smul.addr %s612, 128
          %s614 = scalar_lea.vmem [#allocation8], %s613
          %615 = dma.done %s611, 2048
        $region60: #{residual_block.1} parent=55 // pred_fallthru
          _
      $region56: #{residual_block.1} parent=5 // pred_fallthru
        _
    $region6: #{residual_block.1} parent=1 // loop_footer
      %s21 = sadd.s32 1, %s17
    $region7: #{residual_block.1} parent=1 // loop_footer_branch
      %16 = sbr.rel target = $region3
    $region8: #{residual_block.1} parent=1 // loop_exit
      _
    %616 = vsyncpa [#allocation3], 1
    %s617 = scalar_lea.sflag [#allocation3], 1
    %618 = vsyncpa %s617, 1
    %619 = vsyncpa [#allocation6], 1
    %s620 = scalar_lea.sflag [#allocation6], 1
    %621 = vsyncpa %s620, 1
    %622 = vsyncpa [#allocation4], 1
    %s623 = scalar_lea.sflag [#allocation4], 1
    %624 = vsyncpa %s623, 1

</llo_original>
